<compile_context>
chip_gen: v6e
topology: v6e:2x2x1
jax: 0.10.0
libtpu: 0.0.40
codegen_flags: <defaults>
</compile_context>

<pallas_src>
import functools

import jax
import jax.numpy as jnp
from jax.experimental import pallas as pl
from jax.experimental.pallas import tpu as pltpu


# ----------------------------- kernels ---------------------------------------


def _fused_ca_kernel(x_ref, w1_ref, w2_ref, o_ref, *, inv_hw):
    """Pool + SE-MLP + scale for one batch; the (C, HW) plane stays in VMEM."""
    # Global average pool with f32 accumulation.  keepdims keeps channels on
    # sublanes so the whole pipeline stays in one layout.            (C, 1)
    mean = jnp.sum(x_ref[...].astype(jnp.float32), axis=-1, keepdims=True)[0] * inv_hw
    # Conv2d(C, C//r, 1, bias=False) on the 1x1 map == W1 @ mean     (Cr, 1)
    h = jnp.dot(w1_ref[...], mean, preferred_element_type=jnp.float32)
    h = jnp.maximum(h, 0.0)                                          # ReLU
    # Conv2d(C//r, C, 1, bias=False)                                  (C, 1)
    y = jnp.dot(w2_ref[...], h, preferred_element_type=jnp.float32)
    attn = jax.nn.sigmoid(y)                                         # (C, 1) f32
    # Scale the resident plane in its native dtype; only the tiny attention
    # vector is cast.
    o_ref[...] = x_ref[...] * attn.astype(o_ref.dtype)


def _pool_mlp_kernel(x_ref, w1_ref, w2_ref, attn_ref, acc_ref, *, inv_hw, chunks):
    """Accumulate spatial sums over HW tiles for one batch; MLP on the last."""
    t = pl.program_id(1)

    @pl.when(t == 0)
    def _():
        acc_ref[...] = jnp.zeros_like(acc_ref)

    # Fold this tile's lanes into a 128-wide f32 accumulator using only VPU
    # adds over static 128-aligned slices (no per-step cross-lane XLU work).
    partial = x_ref[:, :, pl.ds(0, 128)].astype(jnp.float32)          # (1, C, 128)
    for j in range(1, chunks):
        partial = partial + x_ref[:, :, pl.ds(j * 128, 128)].astype(jnp.float32)
    acc_ref[...] += partial

    @pl.when(t == pl.num_programs(1) - 1)
    def _():
        # Single cross-lane reduce; channels stay on sublanes.        (C, 1)
        mean = jnp.sum(acc_ref[0], axis=-1, keepdims=True) * inv_hw
        h = jnp.dot(w1_ref[...], mean, preferred_element_type=jnp.float32)
        h = jnp.maximum(h, 0.0)                                        # ReLU
        y = jnp.dot(w2_ref[...], h, preferred_element_type=jnp.float32)
        attn_ref[...] = jax.nn.sigmoid(y)[None]                        # (1, C, 1)


def _scale_kernel(attn_ref, x_ref, o_ref):
    """x * attn with attn broadcast over the spatial (lane) dimension."""
    scale = attn_ref[0].astype(o_ref.dtype)          # (C, 1)
    o_ref[...] = x_ref[...] * scale                  # (1, C, hw_tile)


# ----------------------------- wrapper ----------------------------------------


def _vmem_capacity_bytes():
    try:
        return int(pltpu.get_tpu_info().vmem_capacity_bytes)
    except Exception:
        return 64 << 20  # conservative (v7x-sized) fallback


def _vmem_limit(need_bytes, cap):
    """Per-phase budget + headroom, capped below physical VMEM."""
    return int(min(int(cap * 0.9), max(need_bytes + (8 << 20), 16 << 20)))


def _pow2_lane_tile(hw, row_bytes, target_bytes, cap_lanes):
    """Largest power-of-two multiple of 128 lanes within the byte budget."""
    hw_cap = 128
    while hw_cap < hw:
        hw_cap *= 2
    limit = min(cap_lanes, hw_cap, max(128, target_bytes // max(1, row_bytes)))
    t = 128
    while t * 2 <= limit:
        t *= 2
    return t


def ca_layer(x, w1, w2, *, force_tiled=False):
    """Channel attention forward. x: (B,C,H,W) NCHW, w1: (C//r, C), w2: (C, C//r)."""
    B, C, H, W = x.shape
    Cr = w1.shape[0]
    HW = H * W
    isz = jnp.dtype(x.dtype).itemsize
    w_isz = jnp.dtype(w1.dtype).itemsize
    x_flat = x.reshape(B, C, HW)

    cap = _vmem_capacity_bytes()
    slack = 2 << 20
    w_bytes = 4 * C * Cr * w_isz            # both weights, double-buffered

    # ---------------- fused path: read x from HBM exactly once ----------------
    # Per-batch need: x in + out (double-buffered) + f32 reduce temp + one
    # spare plane for compiler temporaries + weights + slack.
    fused_need = 5 * C * HW * isz + 4 * C * HW + w_bytes + slack
    if not force_tiled and fused_need <= int(cap * 0.7):
        out_flat = pl.pallas_call(
            functools.partial(_fused_ca_kernel, inv_hw=1.0 / HW),
            out_shape=jax.ShapeDtypeStruct((B, C, HW), x.dtype),
            grid_spec=pltpu.PrefetchScalarGridSpec(
                num_scalar_prefetch=0,
                grid=(B,),
                in_specs=[
                    pl.BlockSpec((1, C, HW), lambda b: (b, 0, 0)),
                    pl.BlockSpec((Cr, C), lambda b: (0, 0)),   # W1, resident
                    pl.BlockSpec((C, Cr), lambda b: (0, 0)),   # W2, resident
                ],
                out_specs=pl.BlockSpec((1, C, HW), lambda b: (b, 0, 0)),
            ),
            compiler_params=pltpu.CompilerParams(
                dimension_semantics=("parallel",),
                vmem_limit_bytes=_vmem_limit(fused_need, cap),
            ),
        )(x_flat, w1, w2)
        return out_flat.reshape(B, C, H, W)

    # ---------------- tiled fallback: two passes over HW ----------------------
    pool_tile = _pow2_lane_tile(HW, C * isz, target_bytes=2 << 20, cap_lanes=4096)
    scale_target = (8 << 20) if cap >= (96 << 20) else (4 << 20)
    scale_tile = _pow2_lane_tile(HW, C * isz, target_bytes=scale_target,
                                 cap_lanes=1 << 20)
    big = max(pool_tile, scale_tile)
    hw_pad = ((HW + big - 1) // big) * big
    if hw_pad != HW:
        # Zero padding: sums are unaffected; the mean divides by the true HW.
        x_flat = jnp.pad(x_flat, ((0, 0), (0, 0), (0, hw_pad - HW)))

    # Phase 1: pooled mean + SE-MLP -> per-channel attention, (B, C, 1) f32.
    pool_need = (2 * C * pool_tile * isz + C * 128 * 4 + 2 * C * 4
                 + w_bytes + slack)
    attn = pl.pallas_call(
        functools.partial(_pool_mlp_kernel, inv_hw=1.0 / HW,
                          chunks=pool_tile // 128),
        out_shape=jax.ShapeDtypeStruct((B, C, 1), jnp.float32),
        grid_spec=pltpu.PrefetchScalarGridSpec(
            num_scalar_prefetch=0,
            grid=(B, hw_pad // pool_tile),
            in_specs=[
                pl.BlockSpec((1, C, pool_tile), lambda b, t: (b, 0, t)),
                pl.BlockSpec((Cr, C), lambda b, t: (0, 0)),   # W1, resident
                pl.BlockSpec((C, Cr), lambda b, t: (0, 0)),   # W2, resident
            ],
            out_specs=pl.BlockSpec((1, C, 1), lambda b, t: (b, 0, 0)),
            scratch_shapes=[pltpu.VMEM((1, C, 128), jnp.float32)],
        ),
        compiler_params=pltpu.CompilerParams(
            dimension_semantics=("parallel", "arbitrary"),
            vmem_limit_bytes=_vmem_limit(pool_need, cap),
        ),
    )(x_flat, w1, w2)

    # Phase 2: lane-dense elementwise scaling, both grid axes parallel.
    scale_need = 4 * C * scale_tile * isz + 2 * C * 4 + slack
    out_flat = pl.pallas_call(
        _scale_kernel,
        out_shape=jax.ShapeDtypeStruct((B, C, hw_pad), x.dtype),
        grid_spec=pltpu.PrefetchScalarGridSpec(
            num_scalar_prefetch=0,
            grid=(B, hw_pad // scale_tile),
            in_specs=[
                pl.BlockSpec((1, C, 1), lambda b, t: (b, 0, 0)),            # attn
                pl.BlockSpec((1, C, scale_tile), lambda b, t: (b, 0, t)),   # x
            ],
            out_specs=pl.BlockSpec((1, C, scale_tile), lambda b, t: (b, 0, t)),
        ),
        compiler_params=pltpu.CompilerParams(
            dimension_semantics=("parallel", "parallel"),
            vmem_limit_bytes=_vmem_limit(scale_need, cap),
        ),
    )(attn, x_flat)

    if hw_pad != HW:
        out_flat = out_flat[:, :, :HW]
    return out_flat.reshape(B, C, H, W)


# ----------------------------- reference & test -------------------------------


def reference(x, w1, w2):
    # Pure-JAX reference of the PyTorch forward for verification.
    y = jnp.mean(x, axis=(2, 3), keepdims=True)          # AdaptiveAvgPool2d(1)
    y = jnp.einsum("oc,bcij->boij", w1, y)                # 1x1 conv, no bias
    y = jnp.maximum(y, 0.0)                                # ReLU
    y = jnp.einsum("oc,bcij->boij", w2, y)                # 1x1 conv, no bias
    y = jax.nn.sigmoid(y)                                  # Sigmoid
    return x * y


if __name__ == "__main__":
    key = jax.random.PRNGKey(0)
    B, C, H, W = 2, 64, 16, 16          # HW = 256: lane-dense last dim
    reduction = 16
    Cr = C // reduction

    kx, k1, k2 = jax.random.split(key, 3)
    x = jax.random.normal(kx, (B, C, H, W), dtype=jnp.float32)
    # Conv2d 1x1 (bias=False) weights are plain matrices.
    w1 = jax.random.normal(k1, (Cr, C), dtype=jnp.float32) * 0.1
    w2 = jax.random.normal(k2, (C, Cr), dtype=jnp.float32) * 0.1

    ref = jax.block_until_ready(reference(x, w1, w2))

    # Default (fused, x resident in VMEM) path.
    out = jax.block_until_ready(ca_layer(x, w1, w2))
    assert out.shape == ref.shape, "shape mismatch vs reference"
    assert jnp.allclose(out, ref, atol=1e-5, rtol=1e-5), "fused path mismatch"

    # Tiled fallback path (used for large H*W); exercised here for coverage.
    out_t = jax.block_until_ready(ca_layer(x, w1, w2, force_tiled=True))
    assert jnp.allclose(out_t, ref, atol=1e-5, rtol=1e-5), "tiled path mismatch"

    print("KERNEL_OK")
</pallas_src>

<mosaic_0001>
module attributes {stable_mosaic.version = 11 : i64} {
  func.func @_fused_ca_kernel(%arg0: i32, %arg1: memref<1x64x256xf32, #tpu.memory_space<vmem>>, %arg2: memref<4x64xf32, #tpu.memory_space<vmem>>, %arg3: memref<64x4xf32, #tpu.memory_space<vmem>>, %arg4: memref<1x64x256xf32, #tpu.memory_space<vmem>>) attributes {dimension_semantics = [#tpu.dimension_semantics<parallel>], iteration_bounds = array<i64: 2>, scalar_prefetch = 0 : i64, scratch_operands = 0 : i64, tpu.core_type = #tpu.core_type<tc>, window_params = [{transform_indices = @transform_0, window_bounds = array<i64: 1, 64, 256>}, {pipeline_mode = #tpu.pipeline_mode<synchronous>, transform_indices = @transform_1, window_bounds = array<i64: 4, 64>}, {pipeline_mode = #tpu.pipeline_mode<synchronous>, transform_indices = @transform_2, window_bounds = array<i64: 64, 4>}, {transform_indices = @transform_3, window_bounds = array<i64: 1, 64, 256>}]} {
    %c0 = arith.constant 0 : index
    %c0_0 = arith.constant 0 : index
    %c0_1 = arith.constant 0 : index
    %0 = vector.load %arg1[%c0, %c0_0, %c0_1] : memref<1x64x256xf32, #tpu.memory_space<vmem>>, vector<1x64x256xf32>
    %cst = arith.constant dense<0.000000e+00> : vector<1x64xf32>
    %1 = vector.multi_reduction <add>, %0, %cst [2] : vector<1x64x256xf32> to vector<1x64xf32>
    %2 = vector.shape_cast %1 : vector<1x64xf32> to vector<1x64x1xf32>
    %3 = vector.shape_cast %2 : vector<1x64x1xf32> to vector<64x1xf32>
    %cst_2 = arith.constant 3.906250e-03 : f32
    %4 = vector.broadcast %cst_2 : f32 to vector<64x1xf32>
    %5 = arith.mulf %3, %4 : vector<64x1xf32>
    %c0_3 = arith.constant 0 : index
    %c0_4 = arith.constant 0 : index
    %6 = vector.load %arg2[%c0_3, %c0_4] : memref<4x64xf32, #tpu.memory_space<vmem>>, vector<4x64xf32>
    %cst_5 = arith.constant dense<0.000000e+00> : vector<4x1xf32>
    %7 = tpu.matmul %6, %5, %cst_5 {dimension_numbers = #tpu.dot_dimension_numbers<[1], [0], [0], [1], [0, 0, 1, 1], [], []>} : vector<4x64xf32>, vector<64x1xf32>, vector<4x1xf32> -> vector<4x1xf32>
    %cst_6 = arith.constant 0.000000e+00 : f32
    %8 = vector.broadcast %cst_6 : f32 to vector<4x1xf32>
    %9 = arith.maximumf %7, %8 : vector<4x1xf32>
    %c0_7 = arith.constant 0 : index
    %c0_8 = arith.constant 0 : index
    %10 = vector.load %arg3[%c0_7, %c0_8] : memref<64x4xf32, #tpu.memory_space<vmem>>, vector<64x4xf32>
    %cst_9 = arith.constant dense<0.000000e+00> : vector<64x1xf32>
    %11 = tpu.matmul %10, %9, %cst_9 {dimension_numbers = #tpu.dot_dimension_numbers<[1], [0], [0], [1], [0, 0, 1, 1], [], []>} : vector<64x4xf32>, vector<4x1xf32>, vector<64x1xf32> -> vector<64x1xf32>
    %12 = arith.negf %11 : vector<64x1xf32>
    %13 = math.exp %12 : vector<64x1xf32>
    %cst_10 = arith.constant 1.000000e+00 : f32
    %14 = vector.broadcast %cst_10 : f32 to vector<64x1xf32>
    %15 = arith.addf %14, %13 : vector<64x1xf32>
    %16 = arith.divf %14, %15 : vector<64x1xf32>
    %c0_11 = arith.constant 0 : index
    %c0_12 = arith.constant 0 : index
    %c0_13 = arith.constant 0 : index
    %17 = vector.load %arg1[%c0_11, %c0_12, %c0_13] : memref<1x64x256xf32, #tpu.memory_space<vmem>>, vector<1x64x256xf32>
    %18 = vector.shape_cast %16 : vector<64x1xf32> to vector<1x64x1xf32>
    %19 = vector.broadcast %18 : vector<1x64x1xf32> to vector<1x64x256xf32>
    %20 = arith.mulf %17, %19 : vector<1x64x256xf32>
    %c0_14 = arith.constant 0 : index
    %c0_15 = arith.constant 0 : index
    %c0_16 = arith.constant 0 : index
    %21 = vector.load %arg4[%c0_14, %c0_15, %c0_16] : memref<1x64x256xf32, #tpu.memory_space<vmem>>, vector<1x64x256xf32>
    tpu.vector_store %arg4[%c0_14, %c0_15, %c0_16], %20 {strides = array<i32>} : memref<1x64x256xf32, #tpu.memory_space<vmem>>, vector<1x64x256xf32>,
    return
  }
  func.func @transform_0(%arg0: i32) -> (i32, i32, i32) {
    %c0_i32 = arith.constant 0 : i32
    %c0_i32_0 = arith.constant 0 : i32
    %c0_i32_1 = arith.constant 0 : i32
    return %arg0, %c0_i32, %c0_i32_0 : i32, i32, i32
  }
  func.func @transform_1(%arg0: i32) -> (i32, i32) {
    %c0_i32 = arith.constant 0 : i32
    %c0_i32_0 = arith.constant 0 : i32
    %c0_i32_1 = arith.constant 0 : i32
    return %c0_i32, %c0_i32_0 : i32, i32
  }
  func.func @transform_2(%arg0: i32) -> (i32, i32) {
    %c0_i32 = arith.constant 0 : i32
    %c0_i32_0 = arith.constant 0 : i32
    %c0_i32_1 = arith.constant 0 : i32
    return %c0_i32, %c0_i32_0 : i32, i32
  }
  func.func @transform_3(%arg0: i32) -> (i32, i32, i32) {
    %c0_i32 = arith.constant 0 : i32
    %c0_i32_0 = arith.constant 0 : i32
    %c0_i32_1 = arith.constant 0 : i32
    return %arg0, %c0_i32, %c0_i32_0 : i32, i32, i32
  }
}

</mosaic_0001>

<llo_original>
// kernel: tpu_custom_call.1
$region0: #{tpu_custom_call.1}
  #allocation0 [shape = 'u32[]', space=smem, size = 0x4, offset = 0x4, fixed_abs, tag = 'smem constant byte address 0x4 - core index']
  #allocation1 [shape = 'u32[144,128]{1,0:T(1,128)}', space=vmem, size = 0x12000, scoped, tag = 'internal scratch']
  %s0 = inlined_call_operand.hbm [shape: f32[2,64,256], index: 0, kind: input, shape index: {}]
  %s1 = inlined_call_operand.vmem [shape: f32[4,64], index: 1, kind: input, shape index: {}]
  %s2 = inlined_call_operand.vmem [shape: f32[64,4], index: 2, kind: input, shape index: {}]
  %s3 = inlined_call_operand.hbm [shape: f32[2,64,256], index: 3, kind: output, shape index: {}]
  %s4 = sld [smem:[#allocation0]]
  $region49: #{tpu_custom_call.1} parent=0
    _
  %s6 = ssub.s32 1, %s4
  %s7 = scalar_select 0, %s6, %s4
  $region1: #{tpu_custom_call.1} parent=0
    #allocation2 [shape = 'u8[131072]{0}', space=vmem, size = 0x20000, scoped, tag = 'input window, operand 0']
    #allocation3 [shape = 's32[2]{0}', space=sflag, size = 0x8, scoped, tag = 'scoped memory for tpu_custom_call.1']
    #allocation4 [shape = 's32[2]{0}', space=sflag, size = 0x8, scoped, tag = 'scoped memory for tpu_custom_call.1']
    #allocation5 [shape = 'u8[131072]{0}', space=vmem, size = 0x20000, scoped, tag = 'output window, operand 0']
    %8 = vsyncpa [#allocation3], 0
    %s9 = scalar_lea.sflag [#allocation3], 1
    %10 = vsyncpa %s9, 0
    %11 = vsyncpa [#allocation4], 0
    %s12 = scalar_lea.sflag [#allocation4], 1
    %13 = vsyncpa %s12, 0
    loop: start=0, step=1, limit=4
    $region2: #{tpu_custom_call.1} parent=1 // loop_pre_header
      _
    $region3: #{tpu_custom_call.1} parent=1 // loop_header
      %s15 = sphi 0, %s19
      %p16 = scmp.ge.s32.totalorder %s15, 4
      %s25 = sphi 0, %s27
      %s28 = sphi 0, %s25
      %s29 = sphi 0, %s28
      %s45 = sphi 0, %s29
      %s49 = sphi 0, %s49
      %s51 = sphi 0, %s49
      %s52 = sphi 0, %s51
      %s66 = sphi 0, %s52
      %s70 = sphi 0, %s70
      %s72 = sphi 0, %s70
      %s73 = sphi 0, %s72
      %s87 = sphi 0, %s73
      %s93 = sphi 0, %s95
      %s96 = sphi 0, %s93
      %s97 = sphi 0, %s96
      %s113 = sphi 0, %s97
    $region4: #{tpu_custom_call.1} parent=1 // loop_header_branch
      %18 = sbr.rel (%p16) target = $region8
    $region5: #{tpu_custom_call.1} parent=1 // loop_body
      %s20 = ssub.s32 %s15, 1
      %s21 = ssub.s32 %s15, 2
      %s22 = sadd.s32 %s15, 1
      %s23 = ssub.s32 %s15, %s22
      %p24 = scmp.eq.s32.totalorder %s23, 0
      %s26 = sadd.s32 %s25, 1
      %s27 = scalar_select %p24, %s25, %s26
      %p30 = pneg %p24
      %p31 = scmp.eq.s32.totalorder %s15, 1
      %p32 = por %p30, %p31
      %p33 = scmp.ne.s32.totalorder %s25, %s28
      %p34 = scmp.eq.s32.totalorder %s15, 0
      %p35 = por %p33, %p34
      %p36 = scmp.ne.s32.totalorder %s25, %s28
      %p37 = scmp.eq.s32.totalorder %s20, 1
      %p38 = por %p36, %p37
      %p39 = scmp.ne.s32.totalorder %s28, %s29
      %p40 = scmp.eq.s32.totalorder %s20, 0
      %p41 = por %p39, %p40
      %p42 = scmp.ne.s32.totalorder %s28, %s29
      %p43 = scmp.eq.s32.totalorder %s21, 1
      %p44 = por %p42, %p43
      %p46 = scmp.ne.s32.totalorder %s29, %s45
      %p47 = scmp.eq.s32.totalorder %s21, 0
      %p48 = por %p46, %p47
      %s50 = sadd.s32 %s49, 1
      %p53 = scmp.eq.s32.totalorder %s15, 1
      %p54 = scmp.ne.s32.totalorder %s49, %s51
      %p55 = scmp.eq.s32.totalorder %s15, 0
      %p56 = por %p54, %p55
      %p57 = scmp.ne.s32.totalorder %s49, %s51
      %p58 = scmp.eq.s32.totalorder %s20, 1
      %p59 = por %p57, %p58
      %p60 = scmp.ne.s32.totalorder %s51, %s52
      %p61 = scmp.eq.s32.totalorder %s20, 0
      %p62 = por %p60, %p61
      %p63 = scmp.ne.s32.totalorder %s51, %s52
      %p64 = scmp.eq.s32.totalorder %s21, 1
      %p65 = por %p63, %p64
      %p67 = scmp.ne.s32.totalorder %s52, %s66
      %p68 = scmp.eq.s32.totalorder %s21, 0
      %p69 = por %p67, %p68
      %s71 = sadd.s32 %s70, 1
      %p74 = scmp.eq.s32.totalorder %s15, 1
      %p75 = scmp.ne.s32.totalorder %s70, %s72
      %p76 = scmp.eq.s32.totalorder %s15, 0
      %p77 = por %p75, %p76
      %p78 = scmp.ne.s32.totalorder %s70, %s72
      %p79 = scmp.eq.s32.totalorder %s20, 1
      %p80 = por %p78, %p79
      %p81 = scmp.ne.s32.totalorder %s72, %s73
      %p82 = scmp.eq.s32.totalorder %s20, 0
      %p83 = por %p81, %p82
      %p84 = scmp.ne.s32.totalorder %s72, %s73
      %p85 = scmp.eq.s32.totalorder %s21, 1
      %p86 = por %p84, %p85
      %p88 = scmp.ne.s32.totalorder %s73, %s87
      %p89 = scmp.eq.s32.totalorder %s21, 0
      %p90 = por %p88, %p89
      %s91 = ssub.s32 %s15, %s22
      %p92 = scmp.eq.s32.totalorder %s91, 0
      %s94 = sadd.s32 %s93, 1
      %s95 = scalar_select %p92, %s93, %s94
      %p98 = pneg %p92
      %p99 = scmp.eq.s32.totalorder %s15, 1
      %p100 = por %p98, %p99
      %p101 = scmp.ne.s32.totalorder %s93, %s96
      %p102 = scmp.eq.s32.totalorder %s15, 0
      %p103 = por %p101, %p102
      %p104 = scmp.ne.s32.totalorder %s93, %s96
      %p105 = scmp.eq.s32.totalorder %s20, 1
      %p106 = por %p104, %p105
      %p107 = scmp.ne.s32.totalorder %s96, %s97
      %p108 = scmp.eq.s32.totalorder %s20, 0
      %p109 = por %p107, %p108
      %p110 = scmp.ne.s32.totalorder %s96, %s97
      %p111 = scmp.eq.s32.totalorder %s21, 1
      %p112 = por %p110, %p111
      %p114 = scmp.ne.s32.totalorder %s97, %s113
      %p115 = scmp.eq.s32.totalorder %s21, 0
      %p116 = por %p114, %p115
      %p117 = scmp.le.s32.totalorder 1, %s15
      %p118 = scmp.lt.s32.totalorder %s15, 3
      %p119 = pnand %p117, %p118
      %p120 = pneg %p119
      // Predicated region
      $region9: #{tpu_custom_call.1} parent=5 // pred_check
        _
      $region10: #{tpu_custom_call.1} parent=5 // pred_check_branch
        %122 = sbr.rel (%p119) target = $region12
      $region11: #{tpu_custom_call.1} parent=5 // pred_region
        %s123 = ssub.s32 %s15, 1
        // Predicated region
        $region13: #{tpu_custom_call.1} parent=11 // pred_check
          %p124 = pneg %p62
        $region14: #{tpu_custom_call.1} parent=11 // pred_check_branch
          %126 = sbr.rel (%p124) target = $region16
        $region15: #{tpu_custom_call.1} parent=11 // pred_region
          _
        $region16: #{tpu_custom_call.1} parent=11 // pred_fallthru
          _
        // Predicated region
        $region17: #{tpu_custom_call.1} parent=11 // pred_check
          %p127 = pneg %p83
        $region18: #{tpu_custom_call.1} parent=11 // pred_check_branch
          %129 = sbr.rel (%p127) target = $region20
        $region19: #{tpu_custom_call.1} parent=11 // pred_region
          _
        $region20: #{tpu_custom_call.1} parent=11 // pred_fallthru
          _
      $region12: #{tpu_custom_call.1} parent=5 // pred_fallthru
        _
      %p130 = scmp.lt.s32.totalorder %s15, 2
      // Predicated region
      $region21: #{tpu_custom_call.1} parent=5 // pred_check
        %p131 = pneg %p130
      $region22: #{tpu_custom_call.1} parent=5 // pred_check_branch
        %133 = sbr.rel (%p131) target = $region24
      $region23: #{tpu_custom_call.1} parent=5 // pred_region
        // Predicated region
        $region25: #{tpu_custom_call.1} parent=23 // pred_check
          %p134 = pneg %p35
        $region26: #{tpu_custom_call.1} parent=23 // pred_check_branch
          %136 = sbr.rel (%p134) target = $region28
        $region27: #{tpu_custom_call.1} parent=23 // pred_region
          %s137 = sand.u32 %s25, 1
          %s138 = scalar_lea.sflag [#allocation3], %s137
          %s139 = sand.u32 %s25, 1
          %s140 = smul.addr %s139, 128
          %s141 = scalar_lea.vmem [#allocation2], %s140
          %s143 = ssub.s32 2048, 2048
          %144 = vsyncadd %s138, %s143
          %s145 = smul.addr %s15, 16
          %s146 = smul.addr %s145, 128
          %s147 = scalar_lea.hbm %s0, %s146
          %s148 = sshll.u32 %s141, 4
          %s149 = int_to_ptr.vmem [resolvable:$true] %s148
          %154 = dma.hbm_to_vmem [thread:$0]  %s147, 2048, %s149, %s138, 256, 256, 16
        $region28: #{tpu_custom_call.1} parent=23 // pred_fallthru
          _
      $region24: #{tpu_custom_call.1} parent=5 // pred_fallthru
        _
      %p155 = scmp.le.s32.totalorder 1, %s15
      %p156 = scmp.lt.s32.totalorder %s15, 3
      %p157 = pnand %p155, %p156
      %p158 = pneg %p157
      // Predicated region
      $region29: #{tpu_custom_call.1} parent=5 // pred_check
        _
      $region30: #{tpu_custom_call.1} parent=5 // pred_check_branch
        %160 = sbr.rel (%p157) target = $region32
      $region31: #{tpu_custom_call.1} parent=5 // pred_region
        %s161 = ssub.s32 %s15, 1
        %s162 = sand.u32 %s28, 1
        %s163 = scalar_lea.sflag [#allocation3], %s162
        %s164 = sand.u32 %s28, 1
        %s165 = smul.addr %s164, 128
        %s166 = scalar_lea.vmem [#allocation2], %s165
        // Predicated region
        $region33: #{tpu_custom_call.1} parent=31 // pred_check
          %p167 = pneg %p41
        $region34: #{tpu_custom_call.1} parent=31 // pred_check_branch
          %169 = sbr.rel (%p167) target = $region36
        $region35: #{tpu_custom_call.1} parent=31 // pred_region
          %170 = dma.done %s163, 2048
        $region36: #{tpu_custom_call.1} parent=31 // pred_fallthru
          _
        %s171 = sand.u32 %s28, 1
        %s172 = scalar_lea.sflag [#allocation3], %s171
        %s173 = sand.u32 %s28, 1
        %s174 = smul.addr %s173, 128
        %s175 = scalar_lea.vmem [#allocation2], %s174
        %p176 = pneg %p41
        %p177 = pneg %p38
        %p178 = pneg %p62
        %p179 = pneg %p59
        %p180 = pneg %p83
        %p181 = pneg %p80
        %p182 = pneg %p109
        %p183 = pneg %p106
        %s184 = sand.u32 %s96, 1
        %s185 = scalar_lea.sflag [#allocation4], %s184
        %s186 = sand.u32 %s96, 1
        %s187 = smul.addr %s186, 128
        %s188 = scalar_lea.vmem [#allocation5], %s187
        %v189 = vld [vmem:[%s166] sm:$0xff]
        %v190 = vld [vmem:[%s166 + $0x8] sm:$0xff]
        %v191 = vld [vmem:[%s166 + $0x10] sm:$0xff]
        %v192 = vld [vmem:[%s166 + $0x18] sm:$0xff]
        %v193 = vld [vmem:[%s166 + $0x20] sm:$0xff]
        %v194 = vld [vmem:[%s166 + $0x28] sm:$0xff]
        %v195 = vld [vmem:[%s166 + $0x30] sm:$0xff]
        %v196 = vld [vmem:[%s166 + $0x38] sm:$0xff]
        %v197 = vld [vmem:[%s166 + $0x40] sm:$0xff]
        %v198 = vld [vmem:[%s166 + $0x48] sm:$0xff]
        %v199 = vld [vmem:[%s166 + $0x50] sm:$0xff]
        %v200 = vld [vmem:[%s166 + $0x58] sm:$0xff]
        %v201 = vld [vmem:[%s166 + $0x60] sm:$0xff]
        %v202 = vld [vmem:[%s166 + $0x68] sm:$0xff]
        %v203 = vld [vmem:[%s166 + $0x70] sm:$0xff]
        %v204 = vld [vmem:[%s166 + $0x78] sm:$0xff]
        %v205 = vadd.f32 %v189, %v190
        %206 = vadd.xlane.f32.xlu0 %v205
        %v207 = vpop.xlane.xlu0 %206
        %v208 = vadd.f32 %v191, %v192
        %209 = vadd.xlane.f32.xlu0 %v208
        %v210 = vpop.xlane.xlu0 %209
        %v211 = vadd.f32 %v193, %v194
        %212 = vadd.xlane.f32.xlu0 %v211
        %v213 = vpop.xlane.xlu0 %212
        %v214 = vadd.f32 %v195, %v196
        %215 = vadd.xlane.f32.xlu0 %v214
        %v216 = vpop.xlane.xlu0 %215
        %v217 = vadd.f32 %v197, %v198
        %218 = vadd.xlane.f32.xlu0 %v217
        %v219 = vpop.xlane.xlu0 %218
        %v220 = vadd.f32 %v199, %v200
        %221 = vadd.xlane.f32.xlu0 %v220
        %v222 = vpop.xlane.xlu0 %221
        %v223 = vadd.f32 %v201, %v202
        %224 = vadd.xlane.f32.xlu0 %v223
        %v225 = vpop.xlane.xlu0 %224
        %v226 = vadd.f32 %v203, %v204
        %227 = vadd.xlane.f32.xlu0 %v226
        %v228 = vpop.xlane.xlu0 %227
        %v229 = vmul.f32 %v207, 0.00390625
        %v230 = vmul.f32 %v210, 0.00390625
        %v231 = vmul.f32 %v213, 0.00390625
        %v232 = vmul.f32 %v216, 0.00390625
        %v233 = vmul.f32 %v219, 0.00390625
        %v234 = vmul.f32 %v222, 0.00390625
        %v235 = vmul.f32 %v225, 0.00390625
        %v236 = vmul.f32 %v228, 0.00390625
        %v237 = vld [vmem:[%s1] sm:$0xf]
        %vm238 = vcmask 523264
        %v240 = vsel %vm238, %v237, 0
        %242 = vmatprep.subr.mxu0 0.0
        %243 = vmatpush1.msra.mxu0 0.0
        %244 = vmatprep.subr.mxu0 0.0
        %245 = vmatpush1.msra.mxu0 0.0
        %246 = vmatprep.subr.mxu0 0.0
        %247 = vmatpush1.msra.mxu0 0.0
        %248 = vmatprep.subr.mxu0 0.0
        %249 = vmatpush1.msra.mxu0 0.0
        %250 = vmatprep.subr.mxu0 0.0
        %251 = vmatpush1.msra.mxu0 0.0
        %252 = vmatprep.subr.mxu0 0.0
        %253 = vmatpush1.msra.mxu0 0.0
        %254 = vmatprep.subr.mxu0 0.0
        %255 = vmatpush1.msra.mxu0 0.0
        %256 = vmatprep.subr.mxu0 0.0
        %257 = vmatpush1.msra.mxu0 0.0
        %258 = vmatprep.subr.mxu0 0.0
        %259 = vmatpush1.msra.mxu0 %v236
        %260 = vmatprep.subr.mxu0 0.0
        %261 = vmatpush1.msra.mxu0 %v235
        %262 = vmatprep.subr.mxu0 0.0
        %263 = vmatpush1.msra.mxu0 %v234
        %264 = vmatprep.subr.mxu0 0.0
        %265 = vmatpush1.msra.mxu0 %v233
        %266 = vmatprep.subr.mxu0 0.0
        %267 = vmatpush1.msra.mxu0 %v232
        %268 = vmatprep.subr.mxu0 0.0
        %269 = vmatpush1.msra.mxu0 %v231
        %270 = vmatprep.subr.mxu0 0.0
        %271 = vmatpush1.msra.mxu0 %v230
        %272 = vmatprep.subr.mxu0 0.0
        %273 = vmatpush1.msra.mxu0 %v229
        %274 = vmatprep.subr.mxu0 0.0
        %275 = vmatpush2.msra.mxu0 0.0
        %276 = vmatprep.subr.mxu0 0.0
        %277 = vmatpush2.msra.mxu0 0.0
        %278 = vmatprep.subr.mxu0 0.0
        %279 = vmatpush2.msra.mxu0 0.0
        %280 = vmatprep.subr.mxu0 0.0
        %281 = vmatpush2.msra.mxu0 0.0
        %282 = vmatprep.subr.mxu0 0.0
        %283 = vmatpush2.msra.mxu0 0.0
        %284 = vmatprep.subr.mxu0 0.0
        %285 = vmatpush2.msra.mxu0 0.0
        %286 = vmatprep.subr.mxu0 0.0
        %287 = vmatpush2.msra.mxu0 0.0
        %288 = vmatprep.subr.mxu0 0.0
        %289 = vmatpush2.msra.mxu0 0.0
        %290 = vmatprep.subr.mxu0 0.0
        %291 = vmatpush2.msra.mxu0 0.0
        %292 = vmatprep.subr.mxu0 0.0
        %293 = vmatpush2.msra.mxu0 0.0
        %294 = vmatprep.subr.mxu0 0.0
        %295 = vmatpush2.msra.mxu0 0.0
        %296 = vmatprep.subr.mxu0 0.0
        %297 = vmatpush2.msra.mxu0 0.0
        %298 = vmatprep.subr.mxu0 0.0
        %299 = vmatpush2.msra.mxu0 0.0
        %300 = vmatprep.subr.mxu0 0.0
        %301 = vmatpush2.msra.mxu0 0.0
        %302 = vmatprep.subr.mxu0 0.0
        %303 = vmatpush2.msra.mxu0 0.0
        %304 = vmatprep.subr.mxu0 0.0
        %305 = vmatpush2.msra.mxu0 0.0
        %306 = vmatprep.mubr.f32.mxu0 0.0
        %307 = vmatmul.mubr.f32.gmra.mxu0 %v240
        %v308 = vpop.f32.mrf.mxu0
        %v309 = vadd.f32 0.0, %v308
        %v310 = vpop.f32.mrf.mxu0
        %311 = vdwg.mxu0
        %v312 = vmax.f32 %v309, 0.0
        %v313 = vld [vmem:[%s2] sm:$0xff]
        %v314 = vld [vmem:[%s2 + $0x8] sm:$0xff]
        %v315 = vld [vmem:[%s2 + $0x10] sm:$0xff]
        %v316 = vld [vmem:[%s2 + $0x18] sm:$0xff]
        %v317 = vld [vmem:[%s2 + $0x20] sm:$0xff]
        %v318 = vld [vmem:[%s2 + $0x28] sm:$0xff]
        %v319 = vld [vmem:[%s2 + $0x30] sm:$0xff]
        %v320 = vld [vmem:[%s2 + $0x38] sm:$0xff]
        %vm321 = vcmask 31744
        %v323 = vsel %vm321, %v313, 0
        %v326 = vsel %vm321, %v314, 0
        %v329 = vsel %vm321, %v315, 0
        %v332 = vsel %vm321, %v316, 0
        %v335 = vsel %vm321, %v317, 0
        %v338 = vsel %vm321, %v318, 0
        %v341 = vsel %vm321, %v319, 0
        %v344 = vsel %vm321, %v320, 0
        %vm346 = vcmask 1043456
        %v348 = vsel %vm346, %v312, 0
        %350 = vmatprep.subr.mxu0 0.0
        %351 = vmatpush1.msra.mxu0 0.0
        %352 = vmatprep.subr.mxu0 0.0
        %353 = vmatpush1.msra.mxu0 0.0
        %354 = vmatprep.subr.mxu0 0.0
        %355 = vmatpush1.msra.mxu0 0.0
        %356 = vmatprep.subr.mxu0 0.0
        %357 = vmatpush1.msra.mxu0 0.0
        %358 = vmatprep.subr.mxu0 0.0
        %359 = vmatpush1.msra.mxu0 0.0
        %360 = vmatprep.subr.mxu0 0.0
        %361 = vmatpush1.msra.mxu0 0.0
        %362 = vmatprep.subr.mxu0 0.0
        %363 = vmatpush1.msra.mxu0 0.0
        %364 = vmatprep.subr.mxu0 0.0
        %365 = vmatpush1.msra.mxu0 0.0
        %366 = vmatprep.subr.mxu0 0.0
        %367 = vmatpush1.msra.mxu0 0.0
        %368 = vmatprep.subr.mxu0 0.0
        %369 = vmatpush1.msra.mxu0 0.0
        %370 = vmatprep.subr.mxu0 0.0
        %371 = vmatpush1.msra.mxu0 0.0
        %372 = vmatprep.subr.mxu0 0.0
        %373 = vmatpush1.msra.mxu0 0.0
        %374 = vmatprep.subr.mxu0 0.0
        %375 = vmatpush1.msra.mxu0 0.0
        %376 = vmatprep.subr.mxu0 0.0
        %377 = vmatpush1.msra.mxu0 0.0
        %378 = vmatprep.subr.mxu0 0.0
        %379 = vmatpush1.msra.mxu0 0.0
        %380 = vmatprep.subr.mxu0 0.0
        %381 = vmatpush1.msra.mxu0 %v348
        %382 = vmatprep.subr.mxu0 0.0
        %383 = vmatpush2.msra.mxu0 0.0
        %384 = vmatprep.subr.mxu0 0.0
        %385 = vmatpush2.msra.mxu0 0.0
        %386 = vmatprep.subr.mxu0 0.0
        %387 = vmatpush2.msra.mxu0 0.0
        %388 = vmatprep.subr.mxu0 0.0
        %389 = vmatpush2.msra.mxu0 0.0
        %390 = vmatprep.subr.mxu0 0.0
        %391 = vmatpush2.msra.mxu0 0.0
        %392 = vmatprep.subr.mxu0 0.0
        %393 = vmatpush2.msra.mxu0 0.0
        %394 = vmatprep.subr.mxu0 0.0
        %395 = vmatpush2.msra.mxu0 0.0
        %396 = vmatprep.subr.mxu0 0.0
        %397 = vmatpush2.msra.mxu0 0.0
        %398 = vmatprep.subr.mxu0 0.0
        %399 = vmatpush2.msra.mxu0 0.0
        %400 = vmatprep.subr.mxu0 0.0
        %401 = vmatpush2.msra.mxu0 0.0
        %402 = vmatprep.subr.mxu0 0.0
        %403 = vmatpush2.msra.mxu0 0.0
        %404 = vmatprep.subr.mxu0 0.0
        %405 = vmatpush2.msra.mxu0 0.0
        %406 = vmatprep.subr.mxu0 0.0
        %407 = vmatpush2.msra.mxu0 0.0
        %408 = vmatprep.subr.mxu0 0.0
        %409 = vmatpush2.msra.mxu0 0.0
        %410 = vmatprep.subr.mxu0 0.0
        %411 = vmatpush2.msra.mxu0 0.0
        %412 = vmatprep.subr.mxu0 0.0
        %413 = vmatpush2.msra.mxu0 0.0
        %414 = vmatprep.mubr.f32.mxu0 0.0
        %415 = vmatmul.mubr.f32.gmra.mxu0 %v323
        %v416 = vpop.f32.mrf.mxu0
        %v417 = vadd.f32 0.0, %v416
        %v418 = vpop.f32.mrf.mxu0
        %419 = vmatprep.mubr.f32.mxu0 0.0
        %420 = vmatmul.mubr.f32.gmra.mxu0 %v326
        %v421 = vpop.f32.mrf.mxu0
        %v422 = vadd.f32 0.0, %v421
        %v423 = vpop.f32.mrf.mxu0
        %424 = vmatprep.mubr.f32.mxu0 0.0
        %425 = vmatmul.mubr.f32.gmra.mxu0 %v329
        %v426 = vpop.f32.mrf.mxu0
        %v427 = vadd.f32 0.0, %v426
        %v428 = vpop.f32.mrf.mxu0
        %429 = vmatprep.mubr.f32.mxu0 0.0
        %430 = vmatmul.mubr.f32.gmra.mxu0 %v332
        %v431 = vpop.f32.mrf.mxu0
        %v432 = vadd.f32 0.0, %v431
        %v433 = vpop.f32.mrf.mxu0
        %434 = vmatprep.mubr.f32.mxu0 0.0
        %435 = vmatmul.mubr.f32.gmra.mxu0 %v335
        %v436 = vpop.f32.mrf.mxu0
        %v437 = vadd.f32 0.0, %v436
        %v438 = vpop.f32.mrf.mxu0
        %439 = vmatprep.mubr.f32.mxu0 0.0
        %440 = vmatmul.mubr.f32.gmra.mxu0 %v338
        %v441 = vpop.f32.mrf.mxu0
        %v442 = vadd.f32 0.0, %v441
        %v443 = vpop.f32.mrf.mxu0
        %444 = vmatprep.mubr.f32.mxu0 0.0
        %445 = vmatmul.mubr.f32.gmra.mxu0 %v341
        %v446 = vpop.f32.mrf.mxu0
        %v447 = vadd.f32 0.0, %v446
        %v448 = vpop.f32.mrf.mxu0
        %449 = vmatprep.mubr.f32.mxu0 0.0
        %450 = vmatmul.mubr.f32.gmra.mxu0 %v344
        %v451 = vpop.f32.mrf.mxu0
        %v452 = vadd.f32 0.0, %v451
        %v453 = vpop.f32.mrf.mxu0
        %454 = vdwg.mxu0
        %v455 = vxor.u32 %v417, 2147483648
        %v456 = vxor.u32 %v422, 2147483648
        %v457 = vxor.u32 %v427, 2147483648
        %v458 = vxor.u32 %v432, 2147483648
        %v459 = vxor.u32 %v437, 2147483648
        %v460 = vxor.u32 %v442, 2147483648
        %v461 = vxor.u32 %v447, 2147483648
        %v462 = vxor.u32 %v452, 2147483648
        %v463 = vmul.f32 %v455, 1.442695
        %v464 = vpow.pop %v463
        %v465 = vmul.f32 %v456, 1.442695
        %v466 = vpow.pop %v465
        %v467 = vmul.f32 %v457, 1.442695
        %v468 = vpow.pop %v467
        %v469 = vmul.f32 %v458, 1.442695
        %v470 = vpow.pop %v469
        %v471 = vmul.f32 %v459, 1.442695
        %v472 = vpow.pop %v471
        %v473 = vmul.f32 %v460, 1.442695
        %v474 = vpow.pop %v473
        %v475 = vmul.f32 %v461, 1.442695
        %v476 = vpow.pop %v475
        %v477 = vmul.f32 %v462, 1.442695
        %v478 = vpow.pop %v477
        %v479 = vadd.f32 %v464, 1.0
        %v480 = vadd.f32 %v466, 1.0
        %v481 = vadd.f32 %v468, 1.0
        %v482 = vadd.f32 %v470, 1.0
        %v483 = vadd.f32 %v472, 1.0
        %v484 = vadd.f32 %v474, 1.0
        %v485 = vadd.f32 %v476, 1.0
        %v486 = vadd.f32 %v478, 1.0
        %v487 = vrcp.pop %v479
        %v488 = vmul.f32 1.0, %v487
        %v489 = vrcp.pop %v480
        %v490 = vmul.f32 1.0, %v489
        %v491 = vrcp.pop %v481
        %v492 = vmul.f32 1.0, %v491
        %v493 = vrcp.pop %v482
        %v494 = vmul.f32 1.0, %v493
        %v495 = vrcp.pop %v483
        %v496 = vmul.f32 1.0, %v495
        %v497 = vrcp.pop %v484
        %v498 = vmul.f32 1.0, %v497
        %v499 = vrcp.pop %v485
        %v500 = vmul.f32 1.0, %v499
        %v501 = vrcp.pop %v486
        %v502 = vmul.f32 1.0, %v501
        %504 = vset.pattern.permute.xlu0 0
        %505 = vperm.xlu0 %504, %v488
        %v506 = vpop.permute.xlu0 %505
        %509 = vset.pattern.permute.xlu0 0
        %510 = vperm.xlu0 %509, %v490
        %v511 = vpop.permute.xlu0 %510
        %514 = vset.pattern.permute.xlu0 0
        %515 = vperm.xlu0 %514, %v492
        %v516 = vpop.permute.xlu0 %515
        %519 = vset.pattern.permute.xlu0 0
        %520 = vperm.xlu0 %519, %v494
        %v521 = vpop.permute.xlu0 %520
        %524 = vset.pattern.permute.xlu0 0
        %525 = vperm.xlu0 %524, %v496
        %v526 = vpop.permute.xlu0 %525
        %529 = vset.pattern.permute.xlu0 0
        %530 = vperm.xlu0 %529, %v498
        %v531 = vpop.permute.xlu0 %530
        %534 = vset.pattern.permute.xlu0 0
        %535 = vperm.xlu0 %534, %v500
        %v536 = vpop.permute.xlu0 %535
        %539 = vset.pattern.permute.xlu0 0
        %540 = vperm.xlu0 %539, %v502
        %v541 = vpop.permute.xlu0 %540
        %v543 = vmul.f32 %v189, %v506
        %v544 = vmul.f32 %v190, %v506
        %v545 = vmul.f32 %v191, %v511
        %v546 = vmul.f32 %v192, %v511
        %v547 = vmul.f32 %v193, %v516
        %v548 = vmul.f32 %v194, %v516
        %v549 = vmul.f32 %v195, %v521
        %v550 = vmul.f32 %v196, %v521
        %v551 = vmul.f32 %v197, %v526
        %v552 = vmul.f32 %v198, %v526
        %v553 = vmul.f32 %v199, %v531
        %v554 = vmul.f32 %v200, %v531
        %v555 = vmul.f32 %v201, %v536
        %v556 = vmul.f32 %v202, %v536
        %v557 = vmul.f32 %v203, %v541
        %v558 = vmul.f32 %v204, %v541
        %559 = vst [vmem:[%s188] sm:$0xff] %v543
        %560 = vst [vmem:[%s188 + $0x8] sm:$0xff] %v544
        %561 = vst [vmem:[%s188 + $0x10] sm:$0xff] %v545
        %562 = vst [vmem:[%s188 + $0x18] sm:$0xff] %v546
        %563 = vst [vmem:[%s188 + $0x20] sm:$0xff] %v547
        %564 = vst [vmem:[%s188 + $0x28] sm:$0xff] %v548
        %565 = vst [vmem:[%s188 + $0x30] sm:$0xff] %v549
        %566 = vst [vmem:[%s188 + $0x38] sm:$0xff] %v550
        %567 = vst [vmem:[%s188 + $0x40] sm:$0xff] %v551
        %568 = vst [vmem:[%s188 + $0x48] sm:$0xff] %v552
        %569 = vst [vmem:[%s188 + $0x50] sm:$0xff] %v553
        %570 = vst [vmem:[%s188 + $0x58] sm:$0xff] %v554
        %571 = vst [vmem:[%s188 + $0x60] sm:$0xff] %v555
        %572 = vst [vmem:[%s188 + $0x68] sm:$0xff] %v556
        %573 = vst [vmem:[%s188 + $0x70] sm:$0xff] %v557
        %574 = vst [vmem:[%s188 + $0x78] sm:$0xff] %v558
        %s575 = sand.u32 %s96, 1
        %s576 = scalar_lea.sflag [#allocation4], %s575
        %s577 = sand.u32 %s96, 1
        %s578 = smul.addr %s577, 128
        %s579 = scalar_lea.vmem [#allocation5], %s578
        // Predicated region
        $region37: #{tpu_custom_call.1} parent=31 // pred_check
          %p580 = pneg %p106
        $region38: #{tpu_custom_call.1} parent=31 // pred_check_branch
          %582 = sbr.rel (%p580) target = $region40
        $region39: #{tpu_custom_call.1} parent=31 // pred_region
          %s584 = ssub.s32 2048, 2048
          %585 = vsyncadd %s576, %s584
          %s586 = smul.addr %s20, 16
          %s587 = smul.addr %s586, 128
          %s588 = scalar_lea.hbm %s3, %s587
          %s589 = sshll.u32 %s579, 4
          %s590 = int_to_ptr.vmem [resolvable:$true] %s589
          %595 = dma.vmem_to_hbm [thread:$0]  %s590, 2048, %s588, %s576, 256, 256, 16
        $region40: #{tpu_custom_call.1} parent=31 // pred_fallthru
          _
      $region32: #{tpu_custom_call.1} parent=5 // pred_fallthru
        _
      %p596 = scmp.le.s32.totalorder 2, %s15
      // Predicated region
      $region41: #{tpu_custom_call.1} parent=5 // pred_check
        %p597 = pneg %p596
      $region42: #{tpu_custom_call.1} parent=5 // pred_check_branch
        %599 = sbr.rel (%p597) target = $region44
      $region43: #{tpu_custom_call.1} parent=5 // pred_region
        %s600 = ssub.s32 %s15, 2
        // Predicated region
        $region45: #{tpu_custom_call.1} parent=43 // pred_check
          %p601 = pneg %p112
        $region46: #{tpu_custom_call.1} parent=43 // pred_check_branch
          %603 = sbr.rel (%p601) target = $region48
        $region47: #{tpu_custom_call.1} parent=43 // pred_region
          %s604 = sand.u32 %s97, 1
          %s605 = scalar_lea.sflag [#allocation4], %s604
          %s606 = sand.u32 %s97, 1
          %s607 = smul.addr %s606, 128
          %s608 = scalar_lea.vmem [#allocation5], %s607
          %609 = dma.done %s605, 2048
        $region48: #{tpu_custom_call.1} parent=43 // pred_fallthru
          _
      $region44: #{tpu_custom_call.1} parent=5 // pred_fallthru
        _
    $region6: #{tpu_custom_call.1} parent=1 // loop_footer
      %s19 = sadd.s32 1, %s15
    $region7: #{tpu_custom_call.1} parent=1 // loop_footer_branch
      %14 = sbr.rel target = $region3
    $region8: #{tpu_custom_call.1} parent=1 // loop_exit
      _
    %610 = vsyncpa [#allocation3], 1
    %s611 = scalar_lea.sflag [#allocation3], 1
    %612 = vsyncpa %s611, 1
    %613 = vsyncpa [#allocation4], 1
    %s614 = scalar_lea.sflag [#allocation4], 1
    %615 = vsyncpa %s614, 1

</llo_original>
